<compile_context>
chip_gen: v6e
topology: v6e:2x2x1
jax: 0.10.0
libtpu: 0.0.40
codegen_flags: <defaults>
</compile_context>

<pallas_src>
import jax
import jax.numpy as jnp
from jax import lax
from jax.experimental import pallas as pl
from jax.experimental.pallas import tpu as pltpu

_MIB = 1024 * 1024


# --------------------------------------------------------------------------
# Kernels
# --------------------------------------------------------------------------
def _model_decay_kernel(count_ref, x_ref, we_ref, be_ref, wd_ref, bd_ref,
                        p_ref, lamda_ref, o_ref):
    """relu(x @ We + be) @ Wd + bd + lamda * p on one batch-row tile."""
    del count_ref  # consumed only by the p BlockSpec index_map
    h = jnp.dot(x_ref[...], we_ref[...], preferred_element_type=jnp.float32)
    h = jnp.maximum(h + be_ref[...], 0.0)          # biases pre-cast to f32
    # h is cast to the decoder-weight dtype so bf16 weights would hit the
    # native MXU path; with f32 weights (the reference case) this is a no-op.
    y = jnp.dot(h.astype(wd_ref.dtype), wd_ref[...],
                preferred_element_type=jnp.float32)
    y = y + bd_ref[...]
    y = y + lamda_ref[0] * p_ref[...].astype(jnp.float32)
    o_ref[...] = y.astype(o_ref.dtype)


def _model_kernel(x_ref, we_ref, be_ref, wd_ref, bd_ref, o_ref):
    """relu(x @ We + be) @ Wd + bd on one batch-row tile (lamda == 0 path)."""
    h = jnp.dot(x_ref[...], we_ref[...], preferred_element_type=jnp.float32)
    h = jnp.maximum(h + be_ref[...], 0.0)
    y = jnp.dot(h.astype(wd_ref.dtype), wd_ref[...],
                preferred_element_type=jnp.float32)
    y = y + bd_ref[...]
    o_ref[...] = y.astype(o_ref.dtype)


# --------------------------------------------------------------------------
# Tiling helpers
# --------------------------------------------------------------------------
def _vmem_capacity_bytes():
    try:
        info = pltpu.get_tpu_info()
        return int(getattr(info, "vmem_capacity_bytes", 128 * _MIB))
    except Exception:  # interpret mode / non-TPU backend
        return 128 * _MIB


def _row_tile_cap(D, act_itemsize, n_streams, weight_bytes):
    """Generation-aware row-tile cap, sized against a VMEM budget."""
    # v7x (64 MiB VMEM/TC, ~3.2 TB/s HBM) needs the largest tiles to amortize
    # the ~0.35 us per-grid-step overhead; v5e/v6e saturate HBM around 2K rows.
    vmem_cap = _vmem_capacity_bytes()
    row_cap = 4096 if vmem_cap <= 64 * _MIB else 2048
    # Activation double-buffers must fit a ~24 MiB budget (safe on every
    # generation and leaves compiler-scratch headroom inside v7x's 64 MiB).
    budget = 24 * _MIB - 2 * weight_bytes          # weights are double-buffered
    rows = budget // (2 * n_streams * D * act_itemsize)
    rows = max(8, (rows // 8) * 8)
    return int(min(row_cap, rows))


def _largest_divisor_tile(B, cap):
    """Largest multiple-of-8 divisor of B that is <= cap (None if none)."""
    t = min(cap, B)
    t -= t % 8
    while t >= 8:
        if B % t == 0:
            return t
        t -= 8
    return None


# --------------------------------------------------------------------------
# Wrapper
# --------------------------------------------------------------------------
def data_decay_forward(x, params, p_full, *, lamda, batch_size, count, shape,
                       io_dtype=None, max_tile_rows=None):
    """Forward pass of DataDecayWrapper.

    x:        (B, D) input batch.
    params:   (We, be, Wd, bd) of the wrapped linear autoencoder.
    p_full:   (N, D) decay parameter slab (torch.zeros(shape) at init);
              ignored when lamda == 0.
    io_dtype: optional activation I/O dtype (e.g. jnp.bfloat16) -- the kernel
              is HBM-bound, so halving x/p/out bytes is a near-2x win.
    max_tile_rows: optional override of the generation-aware row-tile cap
              (used by the tests to force multi-step / partial-block grids).

    NOTE: `lamda`, `batch_size` and `count` mirror the PyTorch module's
    host-side state and must be concrete Python numbers here.
    """
    We, be, Wd, bd = params
    B, D = x.shape
    H = We.shape[1]

    if io_dtype is not None and x.dtype != io_dtype:
        # Ideally the caller already stores activations in io_dtype; casting
        # at the boundary still halves the in-kernel HBM traffic.
        x = x.astype(io_dtype)
    act_dtype = x.dtype
    act_itemsize = jnp.dtype(act_dtype).itemsize

    # Pre-cast biases to the f32 compute dtype so the per-grid-step epilogue
    # is pure adds (no cast/broadcast in the loop body).
    be2d = be.astype(jnp.float32).reshape(1, H)
    bd2d = bd.astype(jnp.float32).reshape(1, D)

    weight_bytes = (We.size * We.dtype.itemsize + Wd.size * Wd.dtype.itemsize
                    + be2d.size * 4 + bd2d.size * 4)
    use_decay = (lamda != 0.0)
    n_streams = 3 if use_decay else 2               # x (+ p) + out

    cap = _row_tile_cap(D, act_itemsize, n_streams, weight_bytes)
    if max_tile_rows is not None:
        cap = max(8, (min(cap, int(max_tile_rows)) // 8) * 8)

    # Resident weight / bias specs: same block every grid step, so Pallas DMAs
    # them once per core and keeps them in VMEM.
    # NOTE: if H/D ever grow, keep H a multiple of 128 (256 on v6e/v7x) so the
    # MXU is not half-empty once the kernel stops being memory-bound.
    w_specs = [
        pl.BlockSpec((D, H), lambda i, *_: (0, 0)),   # We
        pl.BlockSpec((1, H), lambda i, *_: (0, 0)),   # be
        pl.BlockSpec((H, D), lambda i, *_: (0, 0)),   # Wd
        pl.BlockSpec((1, D), lambda i, *_: (0, 0)),   # bd
    ]

    def _row_spec(tile_b, index_map):
        return pl.BlockSpec((tile_b, D), index_map)

    def _compiler_params(tile_b):
        vmem_need = 2 * n_streams * tile_b * D * act_itemsize + 2 * weight_bytes
        kwargs = dict(dimension_semantics=("parallel",))
        if vmem_need > 12 * _MIB:
            # v5e's default scoped limit is only 16 MiB: request what we need
            # (+25% headroom), never below 32 MiB (any generation's default)
            # and never above 48 MiB so v7x's 64 MiB physical VMEM keeps room
            # for compiler scratch / semaphores.
            kwargs["vmem_limit_bytes"] = int(
                min(max(vmem_need * 1.25, 32 * _MIB), 48 * _MIB))
        return pltpu.CompilerParams(**kwargs)

    def _cost():
        return pl.CostEstimate(
            flops=4 * B * D * H,                       # two matmuls
            transcendentals=0,
            bytes_accessed=n_streams * B * D * act_itemsize + weight_bytes,
        )

    out_shape = jax.ShapeDtypeStruct((B, D), act_dtype)

    if not use_decay:
        # ---- lamda == 0: no p stream at all (saves a full B*D HBM read). ---
        tile_b = B if B <= cap else cap
        grid = (pl.cdiv(B, tile_b),)
        grid_spec = pltpu.PrefetchScalarGridSpec(
            num_scalar_prefetch=0,
            grid=grid,
            in_specs=[_row_spec(tile_b, lambda i, *_: (i, 0)), *w_specs],
            out_specs=_row_spec(tile_b, lambda i, *_: (i, 0)),
        )
        return pl.pallas_call(
            _model_kernel,
            out_shape=out_shape,
            grid_spec=grid_spec,
            compiler_params=_compiler_params(tile_b),
            cost_estimate=_cost(),
        )(x, We, be2d, Wd, bd2d)

    # ---- decay path --------------------------------------------------------
    if B == batch_size:
        # x + lamda * self.p[self.count]: p rows [count*batch_size, +batch_size)
        # resolved *inside* the pipeline via the scalar-prefetched count.
        tile_b = B if B <= cap else _largest_divisor_tile(B, cap)
        if tile_b is not None and (tile_b % 8 == 0 or tile_b == p_full.shape[0]):
            chunks_per_batch = batch_size // tile_b
            p_index_map = lambda i, cnt: (cnt[0] * chunks_per_batch + i, 0)
            p_operand = p_full
            grid = (B // tile_b,)
        else:
            # Awkward batch size: slice the chunk outside the pipeline (one
            # extra B*D read) and use row-aligned indexing + cdiv grid.
            p_operand = lax.dynamic_slice_in_dim(p_full, count * batch_size,
                                                 batch_size, axis=0)
            p_index_map = lambda i, cnt: (i, 0)
            tile_b = B if B <= cap else cap
            grid = (pl.cdiv(B, tile_b),)
    else:
        # x + lamda * parameters_to_vector(self.p).view(self.shape):
        # p_full already has shape == x.shape, so no host reshape copy.
        p_operand = p_full if p_full.shape == (B, D) else jnp.reshape(p_full, (B, D))
        p_index_map = lambda i, cnt: (i, 0)
        tile_b = B if B <= cap else cap
        grid = (pl.cdiv(B, tile_b),)

    if p_operand.dtype != act_dtype:
        p_operand = p_operand.astype(act_dtype)

    count_arr = jnp.asarray([count], dtype=jnp.int32)     # scalar prefetch
    lamda_arr = jnp.asarray([lamda], dtype=jnp.float32)   # SMEM scalar

    grid_spec = pltpu.PrefetchScalarGridSpec(
        num_scalar_prefetch=1,
        grid=grid,
        in_specs=[_row_spec(tile_b, lambda i, *_: (i, 0)), *w_specs,
                  _row_spec(tile_b, p_index_map),
                  pl.BlockSpec(memory_space=pltpu.MemorySpace.SMEM)],
        out_specs=_row_spec(tile_b, lambda i, *_: (i, 0)),
    )
    return pl.pallas_call(
        _model_decay_kernel,
        out_shape=out_shape,
        grid_spec=grid_spec,
        compiler_params=_compiler_params(tile_b),
        cost_estimate=_cost(),
    )(count_arr, x, We, be2d, Wd, bd2d, p_operand, lamda_arr)


# --------------------------------------------------------------------------
# Pure-JAX reference
# --------------------------------------------------------------------------
def _reference_forward(x, params, p_full, *, lamda, batch_size, count, shape):
    We, be, Wd, bd = params
    y = jnp.maximum(x @ We + be, 0.0) @ Wd + bd
    if lamda != 0.0:
        if x.shape[0] == batch_size:
            y = y + lamda * jax.lax.dynamic_slice_in_dim(
                p_full, count * batch_size, batch_size, axis=0)
        else:
            y = y + lamda * p_full.reshape(x.shape)
    return y


if __name__ == "__main__":
    key = jax.random.PRNGKey(0)
    k_x, k_xf, k_we, k_be, k_wd, k_bd, k_p = jax.random.split(key, 7)

    # Small shapes consistent with the module: `shape` is an (N, D) dataset-
    # sized slab split into batch_size-row decay chunks.  D is lane-dense.
    batch_size = 16
    D = 128        # autoencoder input/output feature dim
    H = 64         # autoencoder hidden dim
    N = 48         # rows in `shape` -> 3 decay chunks
    shape = (N, D)
    lamda = 0.5
    count = 2      # DataDecayWrapper.step() advances this modulo len(p)

    x = jax.random.normal(k_x, (batch_size, D), dtype=jnp.float32)
    We = jax.random.normal(k_we, (D, H), dtype=jnp.float32) * 0.1
    be = jax.random.normal(k_be, (H,), dtype=jnp.float32) * 0.1
    Wd = jax.random.normal(k_wd, (H, D), dtype=jnp.float32) * 0.1
    bd = jax.random.normal(k_bd, (D,), dtype=jnp.float32) * 0.1
    params = (We, be, Wd, bd)

    # torch.zeros(shape) at init; small random values so the decay-add path
    # is actually exercised numerically.
    p_full = jax.random.normal(k_p, shape, dtype=jnp.float32) * 0.01

    def run(xx, **kw):
        return jax.block_until_ready(
            data_decay_forward(xx, params, p_full, batch_size=batch_size,
                               shape=shape, **kw))

    # 1) minibatch branch (x.size(0) == batch_size): p[count] sliced in-kernel.
    ref = _reference_forward(x, params, p_full, lamda=lamda,
                             batch_size=batch_size, count=count, shape=shape)
    out = run(x, lamda=lamda, count=count)
    assert out.shape == (batch_size, D)
    assert jnp.allclose(out, ref, atol=1e-5, rtol=1e-5)

    # 2) same branch, forced 8-row tiles -> multi-step grid with the p chunk
    #    still resolved inside the pipeline via the scalar-prefetched count.
    out2 = run(x, lamda=lamda, count=count, max_tile_rows=8)
    assert jnp.allclose(out2, ref, atol=1e-5, rtol=1e-5)

    # 3) full-dataset branch (x.size(0) != batch_size): whole p slab, no copy.
    x_full = jax.random.normal(k_xf, shape, dtype=jnp.float32)
    ref_full = _reference_forward(x_full, params, p_full, lamda=lamda,
                                  batch_size=batch_size, count=count, shape=shape)
    out3 = run(x_full, lamda=lamda, count=count)
    assert jnp.allclose(out3, ref_full, atol=1e-5, rtol=1e-5)

    # 4) full-dataset branch with a forced 32-row tile: grid = cdiv(48, 32)
    #    exercises the masked partial last block (compute is row-independent).
    out4 = run(x_full, lamda=lamda, count=count, max_tile_rows=32)
    assert jnp.allclose(out4, ref_full, atol=1e-5, rtol=1e-5)

    # 5) lamda == 0 branch: no p stream at all.
    ref0 = _reference_forward(x, params, p_full, lamda=0.0,
                              batch_size=batch_size, count=0, shape=shape)
    out5 = run(x, lamda=0.0, count=0)
    assert jnp.allclose(out5, ref0, atol=1e-5, rtol=1e-5)

    # 6) bf16 activation I/O (kernel is HBM-bound; halves x/p/out traffic).
    out6 = run(x, lamda=lamda, count=count, io_dtype=jnp.bfloat16)
    assert out6.dtype == jnp.bfloat16
    assert jnp.allclose(out6.astype(jnp.float32), ref, atol=1e-1, rtol=1e-1)

    print("KERNEL_OK")
</pallas_src>

<mosaic_0001>
module attributes {stable_mosaic.version = 11 : i64} {
  func.func @_model_decay_kernel(%arg0: i32, %arg1: memref<1xi32, #tpu.memory_space<smem>>, %arg2: memref<16x128xf32, #tpu.memory_space<vmem>>, %arg3: memref<128x64xf32, #tpu.memory_space<vmem>>, %arg4: memref<1x64xf32, #tpu.memory_space<vmem>>, %arg5: memref<64x128xf32, #tpu.memory_space<vmem>>, %arg6: memref<1x128xf32, #tpu.memory_space<vmem>>, %arg7: memref<16x128xf32, #tpu.memory_space<vmem>>, %arg8: memref<1xf32, #tpu.memory_space<smem>>, %arg9: memref<16x128xf32, #tpu.memory_space<vmem>>) attributes {dimension_semantics = [#tpu.dimension_semantics<parallel>], iteration_bounds = array<i64: 1>, scalar_prefetch = 1 : i64, scratch_operands = 0 : i64, tpu.core_type = #tpu.core_type<tc>, window_params = [{transform_indices = @transform_0, window_bounds = array<i64: 16, 128>}, {pipeline_mode = #tpu.pipeline_mode<synchronous>, transform_indices = @transform_1, window_bounds = array<i64: 128, 64>}, {pipeline_mode = #tpu.pipeline_mode<synchronous>, transform_indices = @transform_2, window_bounds = array<i64: 1, 64>}, {pipeline_mode = #tpu.pipeline_mode<synchronous>, transform_indices = @transform_3, window_bounds = array<i64: 64, 128>}, {pipeline_mode = #tpu.pipeline_mode<synchronous>, transform_indices = @transform_4, window_bounds = array<i64: 1, 128>}, {transform_indices = @transform_5, window_bounds = array<i64: 16, 128>}, {transform_indices = @transform_6, window_bounds = array<i64: 1>}, {transform_indices = @transform_7, window_bounds = array<i64: 16, 128>}]} {
    %c0 = arith.constant 0 : index
    %c0_0 = arith.constant 0 : index
    %0 = vector.load %arg2[%c0, %c0_0] : memref<16x128xf32, #tpu.memory_space<vmem>>, vector<16x128xf32>
    %c0_1 = arith.constant 0 : index
    %c0_2 = arith.constant 0 : index
    %1 = vector.load %arg3[%c0_1, %c0_2] : memref<128x64xf32, #tpu.memory_space<vmem>>, vector<128x64xf32>
    %cst = arith.constant dense<0.000000e+00> : vector<16x64xf32>
    %2 = tpu.matmul %0, %1, %cst {dimension_numbers = #tpu.dot_dimension_numbers<[1], [0], [0], [1], [0, 0, 1, 1], [], []>} : vector<16x128xf32>, vector<128x64xf32>, vector<16x64xf32> -> vector<16x64xf32>
    %c0_3 = arith.constant 0 : index
    %c0_4 = arith.constant 0 : index
    %3 = vector.load %arg4[%c0_3, %c0_4] : memref<1x64xf32, #tpu.memory_space<vmem>>, vector<1x64xf32>
    %4 = vector.broadcast %3 : vector<1x64xf32> to vector<16x64xf32>
    %5 = arith.addf %2, %4 : vector<16x64xf32>
    %cst_5 = arith.constant 0.000000e+00 : f32
    %6 = vector.broadcast %cst_5 : f32 to vector<16x64xf32>
    %7 = arith.maximumf %5, %6 : vector<16x64xf32>
    %c0_6 = arith.constant 0 : index
    %c0_7 = arith.constant 0 : index
    %8 = vector.load %arg5[%c0_6, %c0_7] : memref<64x128xf32, #tpu.memory_space<vmem>>, vector<64x128xf32>
    %cst_8 = arith.constant dense<0.000000e+00> : vector<16x128xf32>
    %9 = tpu.matmul %7, %8, %cst_8 {dimension_numbers = #tpu.dot_dimension_numbers<[1], [0], [0], [1], [0, 0, 1, 1], [], []>} : vector<16x64xf32>, vector<64x128xf32>, vector<16x128xf32> -> vector<16x128xf32>
    %c0_9 = arith.constant 0 : index
    %c0_10 = arith.constant 0 : index
    %10 = vector.load %arg6[%c0_9, %c0_10] : memref<1x128xf32, #tpu.memory_space<vmem>>, vector<1x128xf32>
    %11 = vector.broadcast %10 : vector<1x128xf32> to vector<16x128xf32>
    %12 = arith.addf %9, %11 : vector<16x128xf32>
    %c0_11 = arith.constant 0 : index
    %13 = memref.load %arg8[%c0_11] : memref<1xf32, #tpu.memory_space<smem>>
    %c0_12 = arith.constant 0 : index
    %c0_13 = arith.constant 0 : index
    %14 = vector.load %arg7[%c0_12, %c0_13] : memref<16x128xf32, #tpu.memory_space<vmem>>, vector<16x128xf32>
    %15 = vector.broadcast %13 : f32 to vector<16x128xf32>
    %16 = arith.mulf %15, %14 : vector<16x128xf32>
    %17 = arith.addf %12, %16 : vector<16x128xf32>
    %c0_14 = arith.constant 0 : index
    %c0_15 = arith.constant 0 : index
    %18 = vector.load %arg9[%c0_14, %c0_15] : memref<16x128xf32, #tpu.memory_space<vmem>>, vector<16x128xf32>
    tpu.vector_store %arg9[%c0_14, %c0_15], %17 {strides = array<i32>} : memref<16x128xf32, #tpu.memory_space<vmem>>, vector<16x128xf32>,
    return
  }
  func.func @transform_0(%arg0: i32, %arg1: memref<1xi32, #tpu.memory_space<smem>>) -> (i32, i32) {
    %c0_i32 = arith.constant 0 : i32
    %c0_i32_0 = arith.constant 0 : i32
    return %arg0, %c0_i32 : i32, i32
  }
  func.func @transform_1(%arg0: i32, %arg1: memref<1xi32, #tpu.memory_space<smem>>) -> (i32, i32) {
    %c0_i32 = arith.constant 0 : i32
    %c0_i32_0 = arith.constant 0 : i32
    %c0_i32_1 = arith.constant 0 : i32
    return %c0_i32, %c0_i32_0 : i32, i32
  }
  func.func @transform_2(%arg0: i32, %arg1: memref<1xi32, #tpu.memory_space<smem>>) -> (i32, i32) {
    %c0_i32 = arith.constant 0 : i32
    %c0_i32_0 = arith.constant 0 : i32
    %c0_i32_1 = arith.constant 0 : i32
    return %c0_i32, %c0_i32_0 : i32, i32
  }
  func.func @transform_3(%arg0: i32, %arg1: memref<1xi32, #tpu.memory_space<smem>>) -> (i32, i32) {
    %c0_i32 = arith.constant 0 : i32
    %c0_i32_0 = arith.constant 0 : i32
    %c0_i32_1 = arith.constant 0 : i32
    return %c0_i32, %c0_i32_0 : i32, i32
  }
  func.func @transform_4(%arg0: i32, %arg1: memref<1xi32, #tpu.memory_space<smem>>) -> (i32, i32) {
    %c0_i32 = arith.constant 0 : i32
    %c0_i32_0 = arith.constant 0 : i32
    %c0_i32_1 = arith.constant 0 : i32
    return %c0_i32, %c0_i32_0 : i32, i32
  }
  func.func @transform_5(%arg0: i32, %arg1: memref<1xi32, #tpu.memory_space<smem>>) -> (i32, i32) {
    %c0 = arith.constant 0 : index
    %0 = memref.load %arg1[%c0] : memref<1xi32, #tpu.memory_space<smem>>
    %c1_i32 = arith.constant 1 : i32
    %1 = arith.muli %0, %c1_i32 : i32
    %2 = arith.addi %1, %arg0 : i32
    %c0_i32 = arith.constant 0 : i32
    %c0_i32_0 = arith.constant 0 : i32
    return %2, %c0_i32 : i32, i32
  }
  func.func @transform_6(%arg0: i32, %arg1: memref<1xi32, #tpu.memory_space<smem>>) -> i32 {
    %c0_i32 = arith.constant 0 : i32
    %c0_i32_0 = arith.constant 0 : i32
    return %c0_i32 : i32
  }
  func.func @transform_7(%arg0: i32, %arg1: memref<1xi32, #tpu.memory_space<smem>>) -> (i32, i32) {
    %c0_i32 = arith.constant 0 : i32
    %c0_i32_0 = arith.constant 0 : i32
    return %arg0, %c0_i32 : i32, i32
  }
}

</mosaic_0001>

<llo_original>
// kernel: tpu_custom_call.1
$region0: #{tpu_custom_call.1}
  #allocation0 [shape = 'u32[]', space=smem, size = 0x4, offset = 0x4, fixed_abs, tag = 'smem constant byte address 0x4 - core index']
  #allocation1 [shape = 'u32[144,128]{1,0:T(1,128)}', space=vmem, size = 0x12000, scoped, tag = 'internal scratch']
  #allocation2 [shape = 's32[1]{0}', space=sflag, size = 0x4, scoped, tag = 'scoped memory for tpu_custom_call.1']
  #allocation3 [shape = 's32[1]{0:T(128)S(6)}', space=smem, size = 0x200, scoped, tag = 'prefetched SMEM operand 0']
  #allocation4 [shape = 'f32[1]{0:T(128)S(6)}', space=smem, size = 0x200, scoped, tag = 'scoped memory for tpu_custom_call.1']
  %s0 = inlined_call_operand.<no memory space> [shape: s32[1], index: 0, kind: input, shape index: {}]
  %s1 = inlined_call_operand.vmem [shape: f32[16,128], index: 1, kind: input, shape index: {}]
  %s2 = inlined_call_operand.vmem [shape: f32[128,64], index: 2, kind: input, shape index: {}]
  %s3 = inlined_call_operand.vmem [shape: f32[1,64], index: 3, kind: input, shape index: {}]
  %s4 = inlined_call_operand.vmem [shape: f32[64,128], index: 4, kind: input, shape index: {}]
  %s5 = inlined_call_operand.vmem [shape: f32[1,128], index: 5, kind: input, shape index: {}]
  %s6 = inlined_call_operand.vmem [shape: f32[48,128], index: 6, kind: input, shape index: {}]
  %s7 = inlined_call_operand.<no memory space> [shape: f32[1], index: 7, kind: input, shape index: {}]
  %s8 = inlined_call_operand.hbm [shape: f32[16,128], index: 8, kind: output, shape index: {}]
  %s9 = sld [smem:[#allocation0]]
  $region38: #{tpu_custom_call.1} parent=0
    _
  %s11 = ssub.s32 1, %s9
  %s12 = scalar_select 0, %s11, %s9
  %13 = sst [smem:[#allocation3]] %s0
  %14 = sst [smem:[#allocation4]] %s7
  $region1: #{tpu_custom_call.1} parent=0
    #allocation5 [shape = 'u8[8192]{0}', space=vmem, size = 0x2000, scoped, tag = 'output window, operand 0, single buffered']
    #allocation6 [shape = 's32[1]{0}', space=sflag, size = 0x4, scoped, tag = 'scoped memory for tpu_custom_call.1']
    %15 = vsyncpa [#allocation6], 0
    // Predicated region
    $region2: #{tpu_custom_call.1} parent=1 // pred_check
      _
    $region3: #{tpu_custom_call.1} parent=1 // pred_check_branch
      %17 = sbr.rel (0) target = $region5
    $region4: #{tpu_custom_call.1} parent=1 // pred_region
      _
    $region5: #{tpu_custom_call.1} parent=1 // pred_fallthru
      _
    // Predicated region
    $region6: #{tpu_custom_call.1} parent=1 // pred_check
      _
    $region7: #{tpu_custom_call.1} parent=1 // pred_check_branch
      %19 = sbr.rel (0) target = $region9
    $region8: #{tpu_custom_call.1} parent=1 // pred_region
      _
    $region9: #{tpu_custom_call.1} parent=1 // pred_fallthru
      _
    // Predicated region
    $region10: #{tpu_custom_call.1} parent=1 // pred_check
      _
    $region11: #{tpu_custom_call.1} parent=1 // pred_check_branch
      %21 = sbr.rel (0) target = $region13
    $region12: #{tpu_custom_call.1} parent=1 // pred_region
      _
    $region13: #{tpu_custom_call.1} parent=1 // pred_fallthru
      _
    // Predicated region
    $region14: #{tpu_custom_call.1} parent=1 // pred_check
      _
    $region15: #{tpu_custom_call.1} parent=1 // pred_check_branch
      %23 = sbr.rel (0) target = $region17
    $region16: #{tpu_custom_call.1} parent=1 // pred_region
      _
    $region17: #{tpu_custom_call.1} parent=1 // pred_fallthru
      _
    // Predicated region
    $region18: #{tpu_custom_call.1} parent=1 // pred_check
      _
    $region19: #{tpu_custom_call.1} parent=1 // pred_check_branch
      %25 = sbr.rel (0) target = $region21
    $region20: #{tpu_custom_call.1} parent=1 // pred_region
      _
    $region21: #{tpu_custom_call.1} parent=1 // pred_fallthru
      _
    // Predicated region
    $region22: #{tpu_custom_call.1} parent=1 // pred_check
      _
    $region23: #{tpu_custom_call.1} parent=1 // pred_check_branch
      %27 = sbr.rel (0) target = $region25
    $region24: #{tpu_custom_call.1} parent=1 // pred_region
      %s28 = sld [smem:[#allocation3]]
      %s29 = sadd.s32 %s28, 0
      %s30 = smul.u32 2, %s29
      %p31 = scmp.lt.s32.totalorder %s30, 5
      %s32 = scalar_select %p31, %s30, 5
      %s33 = smul.addr %s32, 8
      %s34 = scalar_lea.vmem %s6, %s33
      %s35 = sld [smem:[#allocation3]]
      %s36 = sadd.s32 %s35, 0
      %s37 = smul.u32 2, %s36
    $region25: #{tpu_custom_call.1} parent=1 // pred_fallthru
      _
    // Predicated region
    $region26: #{tpu_custom_call.1} parent=1 // pred_check
      _
    $region27: #{tpu_custom_call.1} parent=1 // pred_check_branch
      %39 = sbr.rel (0) target = $region29
    $region28: #{tpu_custom_call.1} parent=1 // pred_region
      _
    $region29: #{tpu_custom_call.1} parent=1 // pred_fallthru
      _
    %s40 = sld [smem:[#allocation3]]
    %s41 = sadd.s32 %s40, 0
    %s42 = smul.u32 2, %s41
    %p43 = scmp.lt.s32.totalorder %s42, 5
    %s44 = scalar_select %p43, %s42, 5
    %s45 = smul.addr %s44, 8
    %s46 = scalar_lea.vmem %s6, %s45
    %s47 = sld [smem:[#allocation3]]
    %s48 = sadd.s32 %s47, 0
    %s49 = smul.u32 2, %s48
    %p50 = scmp.lt.s32.totalorder %s49, 5
    %s51 = scalar_select %p50, %s49, 5
    %s52 = smul.addr %s51, 8
    %s53 = scalar_lea.vmem %s6, %s52
    %s54 = sld [smem:[#allocation3]]
    %s55 = sadd.s32 %s54, 0
    %s56 = smul.u32 2, %s55
    %v57 = vld [vmem:[%s1] sm:$0xff]
    %v58 = vld [vmem:[%s1 + $0x8] sm:$0xff]
    %v59 = vld [vmem:[%s2] sm:$0xff]
    %v60 = vld [vmem:[%s2 + $0x8] sm:$0xff]
    %v61 = vld [vmem:[%s2 + $0x10] sm:$0xff]
    %v62 = vld [vmem:[%s2 + $0x18] sm:$0xff]
    %v63 = vld [vmem:[%s2 + $0x20] sm:$0xff]
    %v64 = vld [vmem:[%s2 + $0x28] sm:$0xff]
    %v65 = vld [vmem:[%s2 + $0x30] sm:$0xff]
    %v66 = vld [vmem:[%s2 + $0x38] sm:$0xff]
    %v67 = vld [vmem:[%s2 + $0x40] sm:$0xff]
    %v68 = vld [vmem:[%s2 + $0x48] sm:$0xff]
    %v69 = vld [vmem:[%s2 + $0x50] sm:$0xff]
    %v70 = vld [vmem:[%s2 + $0x58] sm:$0xff]
    %v71 = vld [vmem:[%s2 + $0x60] sm:$0xff]
    %v72 = vld [vmem:[%s2 + $0x68] sm:$0xff]
    %v73 = vld [vmem:[%s2 + $0x70] sm:$0xff]
    %v74 = vld [vmem:[%s2 + $0x78] sm:$0xff]
    %v75 = vld [vmem:[%s3] sm:$0x1]
    %v77 = vlaneseq
    %v78 = vshrl.u32 %v77, 7
    %v79 = vsub.s32 0, %v78
    %v80 = vrot.slane %v75, %v79
    %82 = vmatprep.subr.mxu0 0.0
    %83 = vmatpush1.msra.mxu0 %v74
    %84 = vmatprep.subr.mxu0 0.0
    %85 = vmatpush1.msra.mxu0 %v73
    %86 = vmatprep.subr.mxu0 0.0
    %87 = vmatpush1.msra.mxu0 %v72
    %88 = vmatprep.subr.mxu0 0.0
    %89 = vmatpush1.msra.mxu0 %v71
    %90 = vmatprep.subr.mxu0 0.0
    %91 = vmatpush1.msra.mxu0 %v70
    %92 = vmatprep.subr.mxu0 0.0
    %93 = vmatpush1.msra.mxu0 %v69
    %94 = vmatprep.subr.mxu0 0.0
    %95 = vmatpush1.msra.mxu0 %v68
    %96 = vmatprep.subr.mxu0 0.0
    %97 = vmatpush1.msra.mxu0 %v67
    %98 = vmatprep.subr.mxu0 0.0
    %99 = vmatpush1.msra.mxu0 %v66
    %100 = vmatprep.subr.mxu0 0.0
    %101 = vmatpush1.msra.mxu0 %v65
    %102 = vmatprep.subr.mxu0 0.0
    %103 = vmatpush1.msra.mxu0 %v64
    %104 = vmatprep.subr.mxu0 0.0
    %105 = vmatpush1.msra.mxu0 %v63
    %106 = vmatprep.subr.mxu0 0.0
    %107 = vmatpush1.msra.mxu0 %v62
    %108 = vmatprep.subr.mxu0 0.0
    %109 = vmatpush1.msra.mxu0 %v61
    %110 = vmatprep.subr.mxu0 0.0
    %111 = vmatpush1.msra.mxu0 %v60
    %112 = vmatprep.subr.mxu0 0.0
    %113 = vmatpush1.msra.mxu0 %v59
    %114 = vmatprep.subr.mxu0 0.0
    %115 = vmatpush2.msra.mxu0 0.0
    %116 = vmatprep.subr.mxu0 0.0
    %117 = vmatpush2.msra.mxu0 0.0
    %118 = vmatprep.subr.mxu0 0.0
    %119 = vmatpush2.msra.mxu0 0.0
    %120 = vmatprep.subr.mxu0 0.0
    %121 = vmatpush2.msra.mxu0 0.0
    %122 = vmatprep.subr.mxu0 0.0
    %123 = vmatpush2.msra.mxu0 0.0
    %124 = vmatprep.subr.mxu0 0.0
    %125 = vmatpush2.msra.mxu0 0.0
    %126 = vmatprep.subr.mxu0 0.0
    %127 = vmatpush2.msra.mxu0 0.0
    %128 = vmatprep.subr.mxu0 0.0
    %129 = vmatpush2.msra.mxu0 0.0
    %130 = vmatprep.subr.mxu0 0.0
    %131 = vmatpush2.msra.mxu0 0.0
    %132 = vmatprep.subr.mxu0 0.0
    %133 = vmatpush2.msra.mxu0 0.0
    %134 = vmatprep.subr.mxu0 0.0
    %135 = vmatpush2.msra.mxu0 0.0
    %136 = vmatprep.subr.mxu0 0.0
    %137 = vmatpush2.msra.mxu0 0.0
    %138 = vmatprep.subr.mxu0 0.0
    %139 = vmatpush2.msra.mxu0 0.0
    %140 = vmatprep.subr.mxu0 0.0
    %141 = vmatpush2.msra.mxu0 0.0
    %142 = vmatprep.subr.mxu0 0.0
    %143 = vmatpush2.msra.mxu0 0.0
    %144 = vmatprep.subr.mxu0 0.0
    %145 = vmatpush2.msra.mxu0 0.0
    %146 = vmatprep.mubr.f32.mxu0 0.0
    %147 = vmatmul.mubr.f32.gmra.mxu0 %v57
    %v148 = vpop.f32.mrf.mxu0
    %v149 = vadd.f32 %v80, %v148
    %v150 = vpop.f32.mrf.mxu0
    %151 = vmatprep.mubr.f32.mxu0 0.0
    %152 = vmatmul.mubr.f32.gmra.mxu0 %v58
    %v153 = vpop.f32.mrf.mxu0
    %v154 = vadd.f32 %v80, %v153
    %v155 = vpop.f32.mrf.mxu0
    %156 = vdwg.mxu0
    %v157 = vmax.f32 %v149, 0.0
    %v158 = vmax.f32 %v154, 0.0
    %v159 = vld [vmem:[%s4] sm:$0xff]
    %v160 = vld [vmem:[%s4 + $0x8] sm:$0xff]
    %v161 = vld [vmem:[%s4 + $0x10] sm:$0xff]
    %v162 = vld [vmem:[%s4 + $0x18] sm:$0xff]
    %v163 = vld [vmem:[%s4 + $0x20] sm:$0xff]
    %v164 = vld [vmem:[%s4 + $0x28] sm:$0xff]
    %v165 = vld [vmem:[%s4 + $0x30] sm:$0xff]
    %v166 = vld [vmem:[%s4 + $0x38] sm:$0xff]
    %v167 = vld [vmem:[%s5] sm:$0x1]
    %v169 = vlaneseq
    %v170 = vshrl.u32 %v169, 7
    %v171 = vsub.s32 0, %v170
    %v172 = vrot.slane %v167, %v171
    %vm174 = vcmask 523264
    %v176 = vsel %vm174, %v157, 0
    %v179 = vsel %vm174, %v158, 0
    %181 = vmatprep.subr.mxu0 0.0
    %182 = vmatpush1.msra.mxu0 0.0
    %183 = vmatprep.subr.mxu0 0.0
    %184 = vmatpush1.msra.mxu0 0.0
    %185 = vmatprep.subr.mxu0 0.0
    %186 = vmatpush1.msra.mxu0 0.0
    %187 = vmatprep.subr.mxu0 0.0
    %188 = vmatpush1.msra.mxu0 0.0
    %189 = vmatprep.subr.mxu0 0.0
    %190 = vmatpush1.msra.mxu0 0.0
    %191 = vmatprep.subr.mxu0 0.0
    %192 = vmatpush1.msra.mxu0 0.0
    %193 = vmatprep.subr.mxu0 0.0
    %194 = vmatpush1.msra.mxu0 0.0
    %195 = vmatprep.subr.mxu0 0.0
    %196 = vmatpush1.msra.mxu0 0.0
    %197 = vmatprep.subr.mxu0 0.0
    %198 = vmatpush1.msra.mxu0 %v166
    %199 = vmatprep.subr.mxu0 0.0
    %200 = vmatpush1.msra.mxu0 %v165
    %201 = vmatprep.subr.mxu0 0.0
    %202 = vmatpush1.msra.mxu0 %v164
    %203 = vmatprep.subr.mxu0 0.0
    %204 = vmatpush1.msra.mxu0 %v163
    %205 = vmatprep.subr.mxu0 0.0
    %206 = vmatpush1.msra.mxu0 %v162
    %207 = vmatprep.subr.mxu0 0.0
    %208 = vmatpush1.msra.mxu0 %v161
    %209 = vmatprep.subr.mxu0 0.0
    %210 = vmatpush1.msra.mxu0 %v160
    %211 = vmatprep.subr.mxu0 0.0
    %212 = vmatpush1.msra.mxu0 %v159
    %213 = vmatprep.subr.mxu0 0.0
    %214 = vmatpush2.msra.mxu0 0.0
    %215 = vmatprep.subr.mxu0 0.0
    %216 = vmatpush2.msra.mxu0 0.0
    %217 = vmatprep.subr.mxu0 0.0
    %218 = vmatpush2.msra.mxu0 0.0
    %219 = vmatprep.subr.mxu0 0.0
    %220 = vmatpush2.msra.mxu0 0.0
    %221 = vmatprep.subr.mxu0 0.0
    %222 = vmatpush2.msra.mxu0 0.0
    %223 = vmatprep.subr.mxu0 0.0
    %224 = vmatpush2.msra.mxu0 0.0
    %225 = vmatprep.subr.mxu0 0.0
    %226 = vmatpush2.msra.mxu0 0.0
    %227 = vmatprep.subr.mxu0 0.0
    %228 = vmatpush2.msra.mxu0 0.0
    %229 = vmatprep.subr.mxu0 0.0
    %230 = vmatpush2.msra.mxu0 0.0
    %231 = vmatprep.subr.mxu0 0.0
    %232 = vmatpush2.msra.mxu0 0.0
    %233 = vmatprep.subr.mxu0 0.0
    %234 = vmatpush2.msra.mxu0 0.0
    %235 = vmatprep.subr.mxu0 0.0
    %236 = vmatpush2.msra.mxu0 0.0
    %237 = vmatprep.subr.mxu0 0.0
    %238 = vmatpush2.msra.mxu0 0.0
    %239 = vmatprep.subr.mxu0 0.0
    %240 = vmatpush2.msra.mxu0 0.0
    %241 = vmatprep.subr.mxu0 0.0
    %242 = vmatpush2.msra.mxu0 0.0
    %243 = vmatprep.subr.mxu0 0.0
    %244 = vmatpush2.msra.mxu0 0.0
    %245 = vmatprep.mubr.f32.mxu0 0.0
    %246 = vmatmul.mubr.f32.gmra.mxu0 %v176
    %v247 = vpop.f32.mrf.mxu0
    %v248 = vadd.f32 %v172, %v247
    %v249 = vpop.f32.mrf.mxu0
    %250 = vmatprep.mubr.f32.mxu0 0.0
    %251 = vmatmul.mubr.f32.gmra.mxu0 %v179
    %v252 = vpop.f32.mrf.mxu0
    %v253 = vadd.f32 %v172, %v252
    %v254 = vpop.f32.mrf.mxu0
    %255 = vdwg.mxu0
    %s256 = sld [smem:[#allocation4]]
    %v257 = vld [vmem:[%s53] sm:$0xff]
    %v258 = vld [vmem:[%s53 + $0x8] sm:$0xff]
    %v259 = vstv %s256
    %v260 = vmul.f32 %v259, %v257
    %v261 = vmul.f32 %v259, %v258
    %v262 = vadd.f32 %v248, %v260
    %v263 = vadd.f32 %v253, %v261
    %264 = vst [vmem:[#allocation5] sm:$0xff] %v262
    %265 = vst [vmem:[#allocation5 + $0x8] sm:$0xff] %v263
    // Predicated region
    $region30: #{tpu_custom_call.1} parent=1 // pred_check
      _
    $region31: #{tpu_custom_call.1} parent=1 // pred_check_branch
      %267 = sbr.rel (0) target = $region33
    $region32: #{tpu_custom_call.1} parent=1 // pred_region
      %s269 = ssub.s32 256, 256
      %270 = vsyncadd [#allocation6], %s269
      %s271 = sshll.u32 [#allocation5], 4
      %s272 = int_to_ptr.vmem [resolvable:$true] %s271
      %277 = dma.vmem_to_hbm [thread:$0]  %s272, 256, %s8, [#allocation6], 128, 128, 8
    $region33: #{tpu_custom_call.1} parent=1 // pred_fallthru
      _
    // Predicated region
    $region34: #{tpu_custom_call.1} parent=1 // pred_check
      _
    $region35: #{tpu_custom_call.1} parent=1 // pred_check_branch
      %279 = sbr.rel (0) target = $region37
    $region36: #{tpu_custom_call.1} parent=1 // pred_region
      %280 = dma.done [#allocation6], 256
    $region37: #{tpu_custom_call.1} parent=1 // pred_fallthru
      _
    %281 = vsyncpa [#allocation6], 1

</llo_original>
